<compile_context>
chip_gen: v5e
topology: v5e:2x2
jax: 0.10.0
libtpu: 0.0.40
codegen_flags: <defaults>
</compile_context>

<pallas_src>
import functools

import jax
import jax.numpy as jnp
from jax.experimental import pallas as pl
from jax.experimental.pallas import tpu as pltpu


def qlearner_kernel(x_ref, w1_ref, b1_ref, w2_ref, b2_ref, out_ref, *, d_out):
    # Hidden layer: x @ W1 + b1, ReLU.  bf16 x bf16 -> f32 accumulate on MXU.
    h1 = jnp.dot(x_ref[...], w1_ref[...],
                 preferred_element_type=jnp.float32) + b1_ref[...]
    h1 = jnp.maximum(h1, 0.0)

    # Output layer: h1 @ W2 + b2.
    logits = jnp.dot(h1.astype(w2_ref.dtype), w2_ref[...],
                     preferred_element_type=jnp.float32) + b2_ref[...]

    # Mask the zero-padded class lanes so they do not contribute to softmax.
    lane = jax.lax.broadcasted_iota(jnp.int32, logits.shape, dimension=1)
    logits = jnp.where(lane < d_out, logits, -1e30)

    # Numerically stable softmax over the class dimension.
    m = jnp.max(logits, axis=-1, keepdims=True)
    e = jnp.exp(logits - m)
    denom = jnp.sum(e, axis=-1, keepdims=True)
    out_ref[...] = (e * pl.reciprocal(denom, approx=True)).astype(out_ref.dtype)


def _pad2d(a, rows, cols):
    return jnp.pad(a, ((0, rows - a.shape[0]), (0, cols - a.shape[1])))


def qlearner_forward(x, w1, b1, w2, b2, *, tile_m=128, lane=128,
                     compute_dtype=jnp.bfloat16):
    """x: [B, D_in]; w1: [D_in, H1]; b1: [1, H1]; w2: [H1, D_out]; b2: [1, D_out]."""
    B, D_in = x.shape
    H1 = w1.shape[1]
    D_out = w2.shape[1]

    # Pad every feature dim to the 128-lane vreg/MXU width; pad batch to the
    # batch-tile size so the grid divides evenly.
    Dp = pl.cdiv(D_in, lane) * lane
    Hp = pl.cdiv(H1, lane) * lane
    Np = pl.cdiv(D_out, lane) * lane
    TM = tile_m
    Bp = pl.cdiv(B, TM) * TM

    xp = _pad2d(x, Bp, Dp).astype(compute_dtype)
    w1p = _pad2d(w1, Dp, Hp).astype(compute_dtype)
    w2p = _pad2d(w2, Hp, Np).astype(compute_dtype)
    b1p = _pad2d(b1, 1, Hp).astype(jnp.float32)
    b2p = _pad2d(b2, 1, Np).astype(jnp.float32)

    grid = (Bp // TM,)
    itemsize = jnp.dtype(compute_dtype).itemsize
    cost = pl.CostEstimate(
        flops=2 * Bp * (Dp * Hp + Hp * Np),
        transcendentals=Bp * Np,
        bytes_accessed=(Bp * Dp * itemsize + Dp * Hp * itemsize
                        + Hp * Np * itemsize + (Hp + Np) * 4
                        + Bp * Np * 4),
    )

    out_padded = pl.pallas_call(
        functools.partial(qlearner_kernel, d_out=D_out),
        out_shape=jax.ShapeDtypeStruct((Bp, Np), jnp.float32),
        grid=grid,
        in_specs=[
            pl.BlockSpec((TM, Dp), lambda i: (i, 0)),   # x: tiled along batch
            pl.BlockSpec((Dp, Hp), lambda i: (0, 0)),   # W1: resident
            pl.BlockSpec((1, Hp), lambda i: (0, 0)),    # b1: resident
            pl.BlockSpec((Hp, Np), lambda i: (0, 0)),   # W2: resident
            pl.BlockSpec((1, Np), lambda i: (0, 0)),    # b2: resident
        ],
        out_specs=pl.BlockSpec((TM, Np), lambda i: (i, 0)),
        compiler_params=pltpu.CompilerParams(
            dimension_semantics=("parallel",)),
        cost_estimate=cost,
    )(xp, w1p, b1p, w2p, b2p)

    return out_padded[:B, :D_out]


if __name__ == "__main__":
    # Small shapes consistent with the module's forward: 2-D input [B, D_in].
    # B is large enough (2 batch tiles) to exercise the grid pipeline.
    B, D_in, H1, D_out = 256, 32, 64, 16

    key = jax.random.PRNGKey(0)
    kx, kw2, kb2 = jax.random.split(key, 3)

    # Input
    x = jax.random.normal(kx, (B, D_in), dtype=jnp.float32)

    # linear1: weight_init() -> zeros weight, ones bias (stored as [D_in, H1]).
    w1 = jnp.zeros((D_in, H1), dtype=jnp.float32)
    b1 = jnp.ones((1, H1), dtype=jnp.float32)

    # output: PyTorch default Linear init, uniform(-1/sqrt(H1), 1/sqrt(H1)).
    bound = 1.0 / jnp.sqrt(jnp.float32(H1))
    w2 = jax.random.uniform(kw2, (H1, D_out), minval=-bound, maxval=bound,
                            dtype=jnp.float32)
    b2 = jax.random.uniform(kb2, (1, D_out), minval=-bound, maxval=bound,
                            dtype=jnp.float32)

    y = jax.jit(qlearner_forward)(x, w1, b1, w2, b2)
    y = jax.block_until_ready(y)

    # Reference in plain JAX with the same bf16 matmul inputs / f32 accumulation.
    xc, w1c, w2c = (a.astype(jnp.bfloat16) for a in (x, w1, w2))
    h1_ref = jnp.maximum(
        jnp.dot(xc, w1c, preferred_element_type=jnp.float32) + b1, 0.0)
    logits_ref = jnp.dot(h1_ref.astype(jnp.bfloat16), w2c,
                         preferred_element_type=jnp.float32) + b2
    y_ref = jax.nn.softmax(logits_ref, axis=-1)

    assert y.shape == (B, D_out)
    # Tolerance covers the approx (EUP) reciprocal in the softmax epilogue.
    assert jnp.allclose(y, y_ref, atol=5e-3, rtol=5e-3)
    assert jnp.allclose(jnp.sum(y, axis=-1), 1.0, atol=5e-3)

    print("KERNEL_OK")
</pallas_src>

<mosaic_0001>
module attributes {stable_mosaic.version = 11 : i64} {
  func.func @qlearner_kernel(%arg0: i32, %arg1: memref<128x128xbf16, #tpu.memory_space<vmem>>, %arg2: memref<128x128xbf16, #tpu.memory_space<vmem>>, %arg3: memref<1x128xf32, #tpu.memory_space<vmem>>, %arg4: memref<128x128xbf16, #tpu.memory_space<vmem>>, %arg5: memref<1x128xf32, #tpu.memory_space<vmem>>, %arg6: memref<128x128xf32, #tpu.memory_space<vmem>>) attributes {dimension_semantics = [#tpu.dimension_semantics<parallel>], iteration_bounds = array<i64: 2>, scalar_prefetch = 0 : i64, scratch_operands = 0 : i64, tpu.core_type = #tpu.core_type<tc>, window_params = [{transform_indices = @transform_0, window_bounds = array<i64: 128, 128>}, {pipeline_mode = #tpu.pipeline_mode<synchronous>, transform_indices = @transform_1, window_bounds = array<i64: 128, 128>}, {pipeline_mode = #tpu.pipeline_mode<synchronous>, transform_indices = @transform_2, window_bounds = array<i64: 1, 128>}, {pipeline_mode = #tpu.pipeline_mode<synchronous>, transform_indices = @transform_3, window_bounds = array<i64: 128, 128>}, {pipeline_mode = #tpu.pipeline_mode<synchronous>, transform_indices = @transform_4, window_bounds = array<i64: 1, 128>}, {transform_indices = @transform_5, window_bounds = array<i64: 128, 128>}]} {
    %c0 = arith.constant 0 : index
    %c0_0 = arith.constant 0 : index
    %0 = vector.load %arg1[%c0, %c0_0] : memref<128x128xbf16, #tpu.memory_space<vmem>>, vector<128x128xbf16>
    %c0_1 = arith.constant 0 : index
    %c0_2 = arith.constant 0 : index
    %1 = vector.load %arg2[%c0_1, %c0_2] : memref<128x128xbf16, #tpu.memory_space<vmem>>, vector<128x128xbf16>
    %cst = arith.constant dense<0.000000e+00> : vector<128x128xf32>
    %2 = tpu.matmul %0, %1, %cst {dimension_numbers = #tpu.dot_dimension_numbers<[1], [0], [0], [1], [0, 0, 1, 1], [], []>} : vector<128x128xbf16>, vector<128x128xbf16>, vector<128x128xf32> -> vector<128x128xf32>
    %c0_3 = arith.constant 0 : index
    %c0_4 = arith.constant 0 : index
    %3 = vector.load %arg3[%c0_3, %c0_4] : memref<1x128xf32, #tpu.memory_space<vmem>>, vector<1x128xf32>
    %4 = vector.broadcast %3 : vector<1x128xf32> to vector<128x128xf32>
    %5 = arith.addf %2, %4 : vector<128x128xf32>
    %cst_5 = arith.constant 0.000000e+00 : f32
    %6 = vector.broadcast %cst_5 : f32 to vector<128x128xf32>
    %7 = arith.maximumf %5, %6 : vector<128x128xf32>
    %8 = arith.truncf %7 : vector<128x128xf32> to vector<128x128xbf16>
    %c0_6 = arith.constant 0 : index
    %c0_7 = arith.constant 0 : index
    %9 = vector.load %arg4[%c0_6, %c0_7] : memref<128x128xbf16, #tpu.memory_space<vmem>>, vector<128x128xbf16>
    %cst_8 = arith.constant dense<0.000000e+00> : vector<128x128xf32>
    %10 = tpu.matmul %8, %9, %cst_8 {dimension_numbers = #tpu.dot_dimension_numbers<[1], [0], [0], [1], [0, 0, 1, 1], [], []>} : vector<128x128xbf16>, vector<128x128xbf16>, vector<128x128xf32> -> vector<128x128xf32>
    %c0_9 = arith.constant 0 : index
    %c0_10 = arith.constant 0 : index
    %11 = vector.load %arg5[%c0_9, %c0_10] : memref<1x128xf32, #tpu.memory_space<vmem>>, vector<1x128xf32>
    %12 = vector.broadcast %11 : vector<1x128xf32> to vector<128x128xf32>
    %13 = arith.addf %10, %12 : vector<128x128xf32>
    %14 = tpu.iota {dimensions = array<i32: 1>} : vector<128x128xi32>
    %c16_i32 = arith.constant 16 : i32
    %15 = vector.broadcast %c16_i32 : i32 to vector<128x128xi32>
    %16 = arith.cmpi slt, %14, %15 : vector<128x128xi32>
    %cst_11 = arith.constant -1.000000e+30 : f32
    %17 = vector.broadcast %cst_11 : f32 to vector<128x128xf32>
    %18 = arith.select %16, %13, %17 : vector<128x128xi1>, vector<128x128xf32>
    %cst_12 = arith.constant dense<0xFF800000> : vector<128xf32>
    %19 = vector.multi_reduction <maximumf>, %18, %cst_12 [1] : vector<128x128xf32> to vector<128xf32>
    %20 = vector.shape_cast %19 : vector<128xf32> to vector<128x1xf32>
    %21 = vector.broadcast %20 : vector<128x1xf32> to vector<128x128xf32>
    %22 = arith.subf %18, %21 : vector<128x128xf32>
    %23 = math.exp %22 : vector<128x128xf32>
    %cst_13 = arith.constant dense<0.000000e+00> : vector<128xf32>
    %24 = vector.multi_reduction <add>, %23, %cst_13 [1] : vector<128x128xf32> to vector<128xf32>
    %25 = vector.shape_cast %24 : vector<128xf32> to vector<128x1xf32>
    %26 = tpu.reciprocal %25 {approx = true} : vector<128x1xf32> -> vector<128x1xf32>
    %27 = vector.broadcast %26 : vector<128x1xf32> to vector<128x128xf32>
    %28 = arith.mulf %23, %27 : vector<128x128xf32>
    %c0_14 = arith.constant 0 : index
    %c0_15 = arith.constant 0 : index
    %29 = vector.load %arg6[%c0_14, %c0_15] : memref<128x128xf32, #tpu.memory_space<vmem>>, vector<128x128xf32>
    tpu.vector_store %arg6[%c0_14, %c0_15], %28 {strides = array<i32>} : memref<128x128xf32, #tpu.memory_space<vmem>>, vector<128x128xf32>,
    return
  }
  func.func @transform_0(%arg0: i32) -> (i32, i32) {
    %c0_i32 = arith.constant 0 : i32
    %c0_i32_0 = arith.constant 0 : i32
    return %arg0, %c0_i32 : i32, i32
  }
  func.func @transform_1(%arg0: i32) -> (i32, i32) {
    %c0_i32 = arith.constant 0 : i32
    %c0_i32_0 = arith.constant 0 : i32
    %c0_i32_1 = arith.constant 0 : i32
    return %c0_i32, %c0_i32_0 : i32, i32
  }
  func.func @transform_2(%arg0: i32) -> (i32, i32) {
    %c0_i32 = arith.constant 0 : i32
    %c0_i32_0 = arith.constant 0 : i32
    %c0_i32_1 = arith.constant 0 : i32
    return %c0_i32, %c0_i32_0 : i32, i32
  }
  func.func @transform_3(%arg0: i32) -> (i32, i32) {
    %c0_i32 = arith.constant 0 : i32
    %c0_i32_0 = arith.constant 0 : i32
    %c0_i32_1 = arith.constant 0 : i32
    return %c0_i32, %c0_i32_0 : i32, i32
  }
  func.func @transform_4(%arg0: i32) -> (i32, i32) {
    %c0_i32 = arith.constant 0 : i32
    %c0_i32_0 = arith.constant 0 : i32
    %c0_i32_1 = arith.constant 0 : i32
    return %c0_i32, %c0_i32_0 : i32, i32
  }
  func.func @transform_5(%arg0: i32) -> (i32, i32) {
    %c0_i32 = arith.constant 0 : i32
    %c0_i32_0 = arith.constant 0 : i32
    return %arg0, %c0_i32 : i32, i32
  }
}

</mosaic_0001>

<llo_original>
// kernel: qlearner_forward.1
$region0: #{qlearner_forward.1}
  #allocation0 [shape = 'u32[]', space=smem, size = 0x4, offset = 0x4, fixed_abs, tag = 'smem constant byte address 0x4 - core index']
  #allocation1 [shape = 'u32[72,128]{1,0:T(1,128)}', space=vmem, size = 0x9000, scoped, tag = 'internal scratch']
  %s0 = inlined_call_operand.vmem [shape: bf16[256,128], index: 0, kind: input, shape index: {}]
  %s1 = inlined_call_operand.vmem [shape: bf16[128,128], index: 1, kind: input, shape index: {}]
  %s2 = inlined_call_operand.vmem [shape: f32[1,128], index: 2, kind: input, shape index: {}]
  %s3 = inlined_call_operand.vmem [shape: bf16[128,128], index: 3, kind: input, shape index: {}]
  %s4 = inlined_call_operand.vmem [shape: f32[1,128], index: 4, kind: input, shape index: {}]
  %s5 = inlined_call_operand.vmem [shape: f32[256,128], index: 5, kind: output, shape index: {}]
  %s6 = sld [smem:[#allocation0]]
  $region53: #{qlearner_forward.1} parent=0
    _
  %s8 = ssub.s32 1, %s6
  %s9 = scalar_select 0, %s8, %s6
  loop: start=0, step=1, limit=4
  $region2: #{qlearner_forward.1} parent=0 // loop_pre_header
    _
  $region3: #{qlearner_forward.1} parent=0 // loop_header
    %s11 = sphi 0, %s15
    %p12 = scmp.ge.s32.totalorder %s11, 4
    %s21 = sphi 0, %s23
    %s24 = sphi 0, %s21
    %s25 = sphi 0, %s24
    %s41 = sphi 0, %s25
    %s45 = sphi 0, %s45
    %s47 = sphi 0, %s45
    %s48 = sphi 0, %s47
    %s62 = sphi 0, %s48
    %s66 = sphi 0, %s66
    %s68 = sphi 0, %s66
    %s69 = sphi 0, %s68
    %s83 = sphi 0, %s69
    %s87 = sphi 0, %s87
    %s89 = sphi 0, %s87
    %s90 = sphi 0, %s89
    %s104 = sphi 0, %s90
    %s108 = sphi 0, %s108
    %s110 = sphi 0, %s108
    %s111 = sphi 0, %s110
    %s125 = sphi 0, %s111
    %s131 = sphi 0, %s133
    %s134 = sphi 0, %s131
    %s135 = sphi 0, %s134
    %s151 = sphi 0, %s135
  $region4: #{qlearner_forward.1} parent=0 // loop_header_branch
    %14 = sbr.rel (%p12) target = $region8
  $region5: #{qlearner_forward.1} parent=0 // loop_body
    %s16 = ssub.s32 %s11, 1
    %s17 = ssub.s32 %s11, 2
    %s18 = sadd.s32 %s11, 1
    %s19 = ssub.s32 %s11, %s18
    %p20 = scmp.eq.s32.totalorder %s19, 0
    %s22 = sadd.s32 %s21, 1
    %s23 = scalar_select %p20, %s21, %s22
    %p26 = pneg %p20
    %p27 = scmp.eq.s32.totalorder %s11, 1
    %p28 = por %p26, %p27
    %p29 = scmp.ne.s32.totalorder %s21, %s24
    %p30 = scmp.eq.s32.totalorder %s11, 0
    %p31 = por %p29, %p30
    %p32 = scmp.ne.s32.totalorder %s21, %s24
    %p33 = scmp.eq.s32.totalorder %s16, 1
    %p34 = por %p32, %p33
    %p35 = scmp.ne.s32.totalorder %s24, %s25
    %p36 = scmp.eq.s32.totalorder %s16, 0
    %p37 = por %p35, %p36
    %p38 = scmp.ne.s32.totalorder %s24, %s25
    %p39 = scmp.eq.s32.totalorder %s17, 1
    %p40 = por %p38, %p39
    %p42 = scmp.ne.s32.totalorder %s25, %s41
    %p43 = scmp.eq.s32.totalorder %s17, 0
    %p44 = por %p42, %p43
    %s46 = sadd.s32 %s45, 1
    %p49 = scmp.eq.s32.totalorder %s11, 1
    %p50 = scmp.ne.s32.totalorder %s45, %s47
    %p51 = scmp.eq.s32.totalorder %s11, 0
    %p52 = por %p50, %p51
    %p53 = scmp.ne.s32.totalorder %s45, %s47
    %p54 = scmp.eq.s32.totalorder %s16, 1
    %p55 = por %p53, %p54
    %p56 = scmp.ne.s32.totalorder %s47, %s48
    %p57 = scmp.eq.s32.totalorder %s16, 0
    %p58 = por %p56, %p57
    %p59 = scmp.ne.s32.totalorder %s47, %s48
    %p60 = scmp.eq.s32.totalorder %s17, 1
    %p61 = por %p59, %p60
    %p63 = scmp.ne.s32.totalorder %s48, %s62
    %p64 = scmp.eq.s32.totalorder %s17, 0
    %p65 = por %p63, %p64
    %s67 = sadd.s32 %s66, 1
    %p70 = scmp.eq.s32.totalorder %s11, 1
    %p71 = scmp.ne.s32.totalorder %s66, %s68
    %p72 = scmp.eq.s32.totalorder %s11, 0
    %p73 = por %p71, %p72
    %p74 = scmp.ne.s32.totalorder %s66, %s68
    %p75 = scmp.eq.s32.totalorder %s16, 1
    %p76 = por %p74, %p75
    %p77 = scmp.ne.s32.totalorder %s68, %s69
    %p78 = scmp.eq.s32.totalorder %s16, 0
    %p79 = por %p77, %p78
    %p80 = scmp.ne.s32.totalorder %s68, %s69
    %p81 = scmp.eq.s32.totalorder %s17, 1
    %p82 = por %p80, %p81
    %p84 = scmp.ne.s32.totalorder %s69, %s83
    %p85 = scmp.eq.s32.totalorder %s17, 0
    %p86 = por %p84, %p85
    %s88 = sadd.s32 %s87, 1
    %p91 = scmp.eq.s32.totalorder %s11, 1
    %p92 = scmp.ne.s32.totalorder %s87, %s89
    %p93 = scmp.eq.s32.totalorder %s11, 0
    %p94 = por %p92, %p93
    %p95 = scmp.ne.s32.totalorder %s87, %s89
    %p96 = scmp.eq.s32.totalorder %s16, 1
    %p97 = por %p95, %p96
    %p98 = scmp.ne.s32.totalorder %s89, %s90
    %p99 = scmp.eq.s32.totalorder %s16, 0
    %p100 = por %p98, %p99
    %p101 = scmp.ne.s32.totalorder %s89, %s90
    %p102 = scmp.eq.s32.totalorder %s17, 1
    %p103 = por %p101, %p102
    %p105 = scmp.ne.s32.totalorder %s90, %s104
    %p106 = scmp.eq.s32.totalorder %s17, 0
    %p107 = por %p105, %p106
    %s109 = sadd.s32 %s108, 1
    %p112 = scmp.eq.s32.totalorder %s11, 1
    %p113 = scmp.ne.s32.totalorder %s108, %s110
    %p114 = scmp.eq.s32.totalorder %s11, 0
    %p115 = por %p113, %p114
    %p116 = scmp.ne.s32.totalorder %s108, %s110
    %p117 = scmp.eq.s32.totalorder %s16, 1
    %p118 = por %p116, %p117
    %p119 = scmp.ne.s32.totalorder %s110, %s111
    %p120 = scmp.eq.s32.totalorder %s16, 0
    %p121 = por %p119, %p120
    %p122 = scmp.ne.s32.totalorder %s110, %s111
    %p123 = scmp.eq.s32.totalorder %s17, 1
    %p124 = por %p122, %p123
    %p126 = scmp.ne.s32.totalorder %s111, %s125
    %p127 = scmp.eq.s32.totalorder %s17, 0
    %p128 = por %p126, %p127
    %s129 = ssub.s32 %s11, %s18
    %p130 = scmp.eq.s32.totalorder %s129, 0
    %s132 = sadd.s32 %s131, 1
    %s133 = scalar_select %p130, %s131, %s132
    %p136 = pneg %p130
    %p137 = scmp.eq.s32.totalorder %s11, 1
    %p138 = por %p136, %p137
    %p139 = scmp.ne.s32.totalorder %s131, %s134
    %p140 = scmp.eq.s32.totalorder %s11, 0
    %p141 = por %p139, %p140
    %p142 = scmp.ne.s32.totalorder %s131, %s134
    %p143 = scmp.eq.s32.totalorder %s16, 1
    %p144 = por %p142, %p143
    %p145 = scmp.ne.s32.totalorder %s134, %s135
    %p146 = scmp.eq.s32.totalorder %s16, 0
    %p147 = por %p145, %p146
    %p148 = scmp.ne.s32.totalorder %s134, %s135
    %p149 = scmp.eq.s32.totalorder %s17, 1
    %p150 = por %p148, %p149
    %p152 = scmp.ne.s32.totalorder %s135, %s151
    %p153 = scmp.eq.s32.totalorder %s17, 0
    %p154 = por %p152, %p153
    %p155 = scmp.le.s32.totalorder 1, %s11
    %p156 = scmp.lt.s32.totalorder %s11, 3
    %p157 = pnand %p155, %p156
    %p158 = pneg %p157
    // Predicated region
    $region9: #{qlearner_forward.1} parent=5 // pred_check
      _
    $region10: #{qlearner_forward.1} parent=5 // pred_check_branch
      %160 = sbr.rel (%p157) target = $region12
    $region11: #{qlearner_forward.1} parent=5 // pred_region
      %s161 = ssub.s32 %s11, 1
      // Predicated region
      $region13: #{qlearner_forward.1} parent=11 // pred_check
        %p162 = pneg %p58
      $region14: #{qlearner_forward.1} parent=11 // pred_check_branch
        %164 = sbr.rel (%p162) target = $region16
      $region15: #{qlearner_forward.1} parent=11 // pred_region
        _
      $region16: #{qlearner_forward.1} parent=11 // pred_fallthru
        _
      // Predicated region
      $region17: #{qlearner_forward.1} parent=11 // pred_check
        %p165 = pneg %p79
      $region18: #{qlearner_forward.1} parent=11 // pred_check_branch
        %167 = sbr.rel (%p165) target = $region20
      $region19: #{qlearner_forward.1} parent=11 // pred_region
        _
      $region20: #{qlearner_forward.1} parent=11 // pred_fallthru
        _
      // Predicated region
      $region21: #{qlearner_forward.1} parent=11 // pred_check
        %p168 = pneg %p100
      $region22: #{qlearner_forward.1} parent=11 // pred_check_branch
        %170 = sbr.rel (%p168) target = $region24
      $region23: #{qlearner_forward.1} parent=11 // pred_region
        _
      $region24: #{qlearner_forward.1} parent=11 // pred_fallthru
        _
      // Predicated region
      $region25: #{qlearner_forward.1} parent=11 // pred_check
        %p171 = pneg %p121
      $region26: #{qlearner_forward.1} parent=11 // pred_check_branch
        %173 = sbr.rel (%p171) target = $region28
      $region27: #{qlearner_forward.1} parent=11 // pred_region
        _
      $region28: #{qlearner_forward.1} parent=11 // pred_fallthru
        _
    $region12: #{qlearner_forward.1} parent=5 // pred_fallthru
      _
    %p174 = scmp.lt.s32.totalorder %s11, 2
    // Predicated region
    $region29: #{qlearner_forward.1} parent=5 // pred_check
      %p175 = pneg %p174
    $region30: #{qlearner_forward.1} parent=5 // pred_check_branch
      %177 = sbr.rel (%p175) target = $region32
    $region31: #{qlearner_forward.1} parent=5 // pred_region
      // Predicated region
      $region33: #{qlearner_forward.1} parent=31 // pred_check
        %p178 = pneg %p31
      $region34: #{qlearner_forward.1} parent=31 // pred_check_branch
        %180 = sbr.rel (%p178) target = $region36
      $region35: #{qlearner_forward.1} parent=31 // pred_region
        %s181 = smul.u32 16, %s11
        %p182 = scmp.lt.s32.totalorder %s181, 31
        %s183 = scalar_select %p182, %s181, 31
        %s184 = smul.addr %s183, 4
        %s185 = scalar_lea.vmem %s0, %s184
        %s186 = smul.u32 16, %s11
      $region36: #{qlearner_forward.1} parent=31 // pred_fallthru
        _
    $region32: #{qlearner_forward.1} parent=5 // pred_fallthru
      _
    %p187 = scmp.le.s32.totalorder 1, %s11
    %p188 = scmp.lt.s32.totalorder %s11, 3
    %p189 = pnand %p187, %p188
    %p190 = pneg %p189
    // Predicated region
    $region37: #{qlearner_forward.1} parent=5 // pred_check
      _
    $region38: #{qlearner_forward.1} parent=5 // pred_check_branch
      %192 = sbr.rel (%p189) target = $region40
    $region39: #{qlearner_forward.1} parent=5 // pred_region
      %s193 = ssub.s32 %s11, 1
      %s194 = smul.u32 16, %s16
      %p195 = scmp.lt.s32.totalorder %s194, 31
      %s196 = scalar_select %p195, %s194, 31
      %s197 = smul.addr %s196, 4
      %s198 = scalar_lea.vmem %s0, %s197
      %p199 = pneg %p37
      %p200 = pneg %p34
      %p201 = pneg %p58
      %p202 = pneg %p55
      %p203 = pneg %p79
      %p204 = pneg %p76
      %p205 = pneg %p100
      %p206 = pneg %p97
      %p207 = pneg %p121
      %p208 = pneg %p118
      %p209 = pneg %p147
      %p210 = pneg %p144
      %s211 = smul.u32 16, %s16
      %p212 = scmp.lt.s32.totalorder %s211, 31
      %s213 = scalar_select %p212, %s211, 31
      %s214 = smul.addr %s213, 8
      %s215 = scalar_lea.vmem %s5, %s214
      %s216 = smul.u32 16, %s16
      %p217 = scmp.lt.s32.totalorder %s216, 31
      %s218 = scalar_select %p217, %s216, 31
      %s219 = smul.addr %s218, 4
      %s220 = scalar_lea.vmem %s0, %s219
      %s221 = smul.u32 16, %s16
      %s222 = smul.u32 16, %s16
      %p223 = scmp.lt.s32.totalorder %s222, 31
      %s224 = scalar_select %p223, %s222, 31
      %s225 = smul.addr %s224, 8
      %s226 = scalar_lea.vmem %s5, %s225
      %s227 = smul.u32 16, %s16
      %v228 = vld [vmem:[%s220] sm:$0xf]
      %v229 = vld [vmem:[%s220 + $0x4] sm:$0xf]
      %v230 = vld [vmem:[%s220 + $0x8] sm:$0xf]
      %v231 = vld [vmem:[%s220 + $0xc] sm:$0xf]
      %v232 = vld [vmem:[%s220 + $0x10] sm:$0xf]
      %v233 = vld [vmem:[%s220 + $0x14] sm:$0xf]
      %v234 = vld [vmem:[%s220 + $0x18] sm:$0xf]
      %v235 = vld [vmem:[%s220 + $0x1c] sm:$0xf]
      %v236 = vld [vmem:[%s220 + $0x20] sm:$0xf]
      %v237 = vld [vmem:[%s220 + $0x24] sm:$0xf]
      %v238 = vld [vmem:[%s220 + $0x28] sm:$0xf]
      %v239 = vld [vmem:[%s220 + $0x2c] sm:$0xf]
      %v240 = vld [vmem:[%s220 + $0x30] sm:$0xf]
      %v241 = vld [vmem:[%s220 + $0x34] sm:$0xf]
      %v242 = vld [vmem:[%s220 + $0x38] sm:$0xf]
      %v243 = vld [vmem:[%s220 + $0x3c] sm:$0xf]
      %v244 = vld [vmem:[%s1] sm:$0xf]
      %v245 = vld [vmem:[%s1 + $0x4] sm:$0xf]
      %v246 = vld [vmem:[%s1 + $0x8] sm:$0xf]
      %v247 = vld [vmem:[%s1 + $0xc] sm:$0xf]
      %v248 = vld [vmem:[%s1 + $0x10] sm:$0xf]
      %v249 = vld [vmem:[%s1 + $0x14] sm:$0xf]
      %v250 = vld [vmem:[%s1 + $0x18] sm:$0xf]
      %v251 = vld [vmem:[%s1 + $0x1c] sm:$0xf]
      %v252 = vld [vmem:[%s1 + $0x20] sm:$0xf]
      %v253 = vld [vmem:[%s1 + $0x24] sm:$0xf]
      %v254 = vld [vmem:[%s1 + $0x28] sm:$0xf]
      %v255 = vld [vmem:[%s1 + $0x2c] sm:$0xf]
      %v256 = vld [vmem:[%s1 + $0x30] sm:$0xf]
      %v257 = vld [vmem:[%s1 + $0x34] sm:$0xf]
      %v258 = vld [vmem:[%s1 + $0x38] sm:$0xf]
      %v259 = vld [vmem:[%s1 + $0x3c] sm:$0xf]
      %v260 = vld [vmem:[%s2] sm:$0x1]
      %v262 = vperm.slane %v260, 0
      %v280 = vunpack.c.l.b16 %v228
      %v281 = vunpack.c.l.b16 %v229
      %v282 = vunpack.c.l.b16 %v230
      %v283 = vunpack.c.l.b16 %v231
      %v284 = vunpack.c.l.b16 %v232
      %v285 = vunpack.c.l.b16 %v233
      %v286 = vunpack.c.l.b16 %v234
      %v287 = vunpack.c.l.b16 %v235
      %v288 = vunpack.c.l.b16 %v236
      %v289 = vunpack.c.l.b16 %v237
      %v290 = vunpack.c.l.b16 %v238
      %v291 = vunpack.c.l.b16 %v239
      %v292 = vunpack.c.l.b16 %v240
      %v293 = vunpack.c.l.b16 %v241
      %v294 = vunpack.c.l.b16 %v242
      %v295 = vunpack.c.l.b16 %v243
      %v296 = vpack.c.b16 %v281, %v280
      %v297 = vpack.c.b16 %v283, %v282
      %v298 = vpack.c.b16 %v285, %v284
      %v299 = vpack.c.b16 %v287, %v286
      %v300 = vpack.c.b16 %v289, %v288
      %v301 = vpack.c.b16 %v291, %v290
      %v302 = vpack.c.b16 %v293, %v292
      %v303 = vpack.c.b16 %v295, %v294
      %v328 = vunpack.c.l.b16 %v244
      %v329 = vunpack.c.l.b16 %v245
      %v330 = vunpack.c.l.b16 %v246
      %v331 = vunpack.c.l.b16 %v247
      %v332 = vunpack.c.l.b16 %v248
      %v333 = vunpack.c.l.b16 %v249
      %v334 = vunpack.c.l.b16 %v250
      %v335 = vunpack.c.l.b16 %v251
      %v336 = vunpack.c.l.b16 %v252
      %v337 = vunpack.c.l.b16 %v253
      %v338 = vunpack.c.l.b16 %v254
      %v339 = vunpack.c.l.b16 %v255
      %v340 = vunpack.c.l.b16 %v256
      %v341 = vunpack.c.l.b16 %v257
      %v342 = vunpack.c.l.b16 %v258
      %v343 = vunpack.c.l.b16 %v259
      %v344 = vpack.c.b16 %v329, %v328
      %v345 = vpack.c.b16 %v331, %v330
      %v346 = vpack.c.b16 %v333, %v332
      %v347 = vpack.c.b16 %v335, %v334
      %v348 = vpack.c.b16 %v337, %v336
      %v349 = vpack.c.b16 %v339, %v338
      %v350 = vpack.c.b16 %v341, %v340
      %v351 = vpack.c.b16 %v343, %v342
      %360 = vmatpush.bf16.msra.mxu0 %v351
      %361 = vmatpush.bf16.msra.mxu0 %v350
      %362 = vmatpush.bf16.msra.mxu0 %v349
      %363 = vmatpush.bf16.msra.mxu0 %v348
      %364 = vmatpush.bf16.msra.mxu0 %v347
      %365 = vmatpush.bf16.msra.mxu0 %v346
      %366 = vmatpush.bf16.msra.mxu0 %v345
      %367 = vmatpush.bf16.msra.mxu0 %v344
      %368 = vmatmul.bf16.gmra.mxu0 %v296
      %v369 = vpop.f32.mrf.mxu0
      %v370 = vadd.f32 %v262, %v369
      %v371 = vpop.f32.mrf.mxu0
      %v372 = vadd.f32 %v262, %v371
      %373 = vmatmul.bf16.gmra.mxu0 %v297
      %v374 = vpop.f32.mrf.mxu0
      %v375 = vadd.f32 %v262, %v374
      %v376 = vpop.f32.mrf.mxu0
      %v377 = vadd.f32 %v262, %v376
      %378 = vmatmul.bf16.gmra.mxu0 %v298
      %v379 = vpop.f32.mrf.mxu0
      %v380 = vadd.f32 %v262, %v379
      %v381 = vpop.f32.mrf.mxu0
      %v382 = vadd.f32 %v262, %v381
      %383 = vmatmul.bf16.gmra.mxu0 %v299
      %v384 = vpop.f32.mrf.mxu0
      %v385 = vadd.f32 %v262, %v384
      %v386 = vpop.f32.mrf.mxu0
      %v387 = vadd.f32 %v262, %v386
      %388 = vmatmul.bf16.gmra.mxu0 %v300
      %v389 = vpop.f32.mrf.mxu0
      %v390 = vadd.f32 %v262, %v389
      %v391 = vpop.f32.mrf.mxu0
      %v392 = vadd.f32 %v262, %v391
      %393 = vmatmul.bf16.gmra.mxu0 %v301
      %v394 = vpop.f32.mrf.mxu0
      %v395 = vadd.f32 %v262, %v394
      %v396 = vpop.f32.mrf.mxu0
      %v397 = vadd.f32 %v262, %v396
      %398 = vmatmul.bf16.gmra.mxu0 %v302
      %v399 = vpop.f32.mrf.mxu0
      %v400 = vadd.f32 %v262, %v399
      %v401 = vpop.f32.mrf.mxu0
      %v402 = vadd.f32 %v262, %v401
      %403 = vmatmul.bf16.gmra.mxu0 %v303
      %v404 = vpop.f32.mrf.mxu0
      %v405 = vadd.f32 %v262, %v404
      %v406 = vpop.f32.mrf.mxu0
      %v407 = vadd.f32 %v262, %v406
      %408 = vdwg.mxu0
      %v409 = vmax.f32 %v370, 0.0
      %v410 = vmax.f32 %v372, 0.0
      %v411 = vmax.f32 %v375, 0.0
      %v412 = vmax.f32 %v377, 0.0
      %v413 = vmax.f32 %v380, 0.0
      %v414 = vmax.f32 %v382, 0.0
      %v415 = vmax.f32 %v385, 0.0
      %v416 = vmax.f32 %v387, 0.0
      %v417 = vmax.f32 %v390, 0.0
      %v418 = vmax.f32 %v392, 0.0
      %v419 = vmax.f32 %v395, 0.0
      %v420 = vmax.f32 %v397, 0.0
      %v421 = vmax.f32 %v400, 0.0
      %v422 = vmax.f32 %v402, 0.0
      %v423 = vmax.f32 %v405, 0.0
      %v424 = vmax.f32 %v407, 0.0
      %v425 = vpack.c.bf16 %v410, %v409
      %v426 = vpack.c.bf16 %v412, %v411
      %v427 = vpack.c.bf16 %v414, %v413
      %v428 = vpack.c.bf16 %v416, %v415
      %v429 = vpack.c.bf16 %v418, %v417
      %v430 = vpack.c.bf16 %v420, %v419
      %v431 = vpack.c.bf16 %v422, %v421
      %v432 = vpack.c.bf16 %v424, %v423
      %v433 = vld [vmem:[%s3] sm:$0xf]
      %v434 = vld [vmem:[%s3 + $0x4] sm:$0xf]
      %v435 = vld [vmem:[%s3 + $0x8] sm:$0xf]
      %v436 = vld [vmem:[%s3 + $0xc] sm:$0xf]
      %v437 = vld [vmem:[%s3 + $0x10] sm:$0xf]
      %v438 = vld [vmem:[%s3 + $0x14] sm:$0xf]
      %v439 = vld [vmem:[%s3 + $0x18] sm:$0xf]
      %v440 = vld [vmem:[%s3 + $0x1c] sm:$0xf]
      %v441 = vld [vmem:[%s3 + $0x20] sm:$0xf]
      %v442 = vld [vmem:[%s3 + $0x24] sm:$0xf]
      %v443 = vld [vmem:[%s3 + $0x28] sm:$0xf]
      %v444 = vld [vmem:[%s3 + $0x2c] sm:$0xf]
      %v445 = vld [vmem:[%s3 + $0x30] sm:$0xf]
      %v446 = vld [vmem:[%s3 + $0x34] sm:$0xf]
      %v447 = vld [vmem:[%s3 + $0x38] sm:$0xf]
      %v448 = vld [vmem:[%s3 + $0x3c] sm:$0xf]
      %v449 = vld [vmem:[%s4] sm:$0x1]
      %v451 = vperm.slane %v449, 0
      %v469 = vunpack.c.l.b16 %v433
      %v470 = vunpack.c.l.b16 %v434
      %v471 = vunpack.c.l.b16 %v435
      %v472 = vunpack.c.l.b16 %v436
      %v473 = vunpack.c.l.b16 %v437
      %v474 = vunpack.c.l.b16 %v438
      %v475 = vunpack.c.l.b16 %v439
      %v476 = vunpack.c.l.b16 %v440
      %v477 = vunpack.c.l.b16 %v441
      %v478 = vunpack.c.l.b16 %v442
      %v479 = vunpack.c.l.b16 %v443
      %v480 = vunpack.c.l.b16 %v444
      %v481 = vunpack.c.l.b16 %v445
      %v482 = vunpack.c.l.b16 %v446
      %v483 = vunpack.c.l.b16 %v447
      %v484 = vunpack.c.l.b16 %v448
      %v485 = vpack.c.b16 %v470, %v469
      %v486 = vpack.c.b16 %v472, %v471
      %v487 = vpack.c.b16 %v474, %v473
      %v488 = vpack.c.b16 %v476, %v475
      %v489 = vpack.c.b16 %v478, %v477
      %v490 = vpack.c.b16 %v480, %v479
      %v491 = vpack.c.b16 %v482, %v481
      %v492 = vpack.c.b16 %v484, %v483
      %501 = vmatpush.bf16.msra.mxu0 %v492
      %502 = vmatpush.bf16.msra.mxu0 %v491
      %503 = vmatpush.bf16.msra.mxu0 %v490
      %504 = vmatpush.bf16.msra.mxu0 %v489
      %505 = vmatpush.bf16.msra.mxu0 %v488
      %506 = vmatpush.bf16.msra.mxu0 %v487
      %507 = vmatpush.bf16.msra.mxu0 %v486
      %508 = vmatpush.bf16.msra.mxu0 %v485
      %509 = vmatmul.bf16.gmra.mxu0 %v425
      %v510 = vpop.f32.mrf.mxu0
      %v511 = vadd.f32 %v451, %v510
      %v512 = vpop.f32.mrf.mxu0
      %v513 = vadd.f32 %v451, %v512
      %514 = vmatmul.bf16.gmra.mxu0 %v426
      %v515 = vpop.f32.mrf.mxu0
      %v516 = vadd.f32 %v451, %v515
      %v517 = vpop.f32.mrf.mxu0
      %v518 = vadd.f32 %v451, %v517
      %519 = vmatmul.bf16.gmra.mxu0 %v427
      %v520 = vpop.f32.mrf.mxu0
      %v521 = vadd.f32 %v451, %v520
      %v522 = vpop.f32.mrf.mxu0
      %v523 = vadd.f32 %v451, %v522
      %524 = vmatmul.bf16.gmra.mxu0 %v428
      %v525 = vpop.f32.mrf.mxu0
      %v526 = vadd.f32 %v451, %v525
      %v527 = vpop.f32.mrf.mxu0
      %v528 = vadd.f32 %v451, %v527
      %529 = vmatmul.bf16.gmra.mxu0 %v429
      %v530 = vpop.f32.mrf.mxu0
      %v531 = vadd.f32 %v451, %v530
      %v532 = vpop.f32.mrf.mxu0
      %v533 = vadd.f32 %v451, %v532
      %534 = vmatmul.bf16.gmra.mxu0 %v430
      %v535 = vpop.f32.mrf.mxu0
      %v536 = vadd.f32 %v451, %v535
      %v537 = vpop.f32.mrf.mxu0
      %v538 = vadd.f32 %v451, %v537
      %539 = vmatmul.bf16.gmra.mxu0 %v431
      %v540 = vpop.f32.mrf.mxu0
      %v541 = vadd.f32 %v451, %v540
      %v542 = vpop.f32.mrf.mxu0
      %v543 = vadd.f32 %v451, %v542
      %544 = vmatmul.bf16.gmra.mxu0 %v432
      %v545 = vpop.f32.mrf.mxu0
      %v546 = vadd.f32 %v451, %v545
      %v547 = vpop.f32.mrf.mxu0
      %v548 = vadd.f32 %v451, %v547
      %549 = vdwg.mxu0
      %v550 = vlaneseq
      %v551 = vand.u32 %v550, 127
      %vm552 = vcmp.lt.s32.totalorder %v551, 16
      %v553 = vsel %vm552, %v511, -1e+30
      %v554 = vsel %vm552, %v513, -1e+30
      %v555 = vsel %vm552, %v516, -1e+30
      %v556 = vsel %vm552, %v518, -1e+30
      %v557 = vsel %vm552, %v521, -1e+30
      %v558 = vsel %vm552, %v523, -1e+30
      %v559 = vsel %vm552, %v526, -1e+30
      %v560 = vsel %vm552, %v528, -1e+30
      %v561 = vsel %vm552, %v531, -1e+30
      %v562 = vsel %vm552, %v533, -1e+30
      %v563 = vsel %vm552, %v536, -1e+30
      %v564 = vsel %vm552, %v538, -1e+30
      %v565 = vsel %vm552, %v541, -1e+30
      %v566 = vsel %vm552, %v543, -1e+30
      %v567 = vsel %vm552, %v546, -1e+30
      %v568 = vsel %vm552, %v548, -1e+30
      %569 = vmax.xlane.f32.xlu0 %v553
      %v570 = vpop.xlane.xlu0 %569
      %571 = vmax.xlane.f32.xlu0 %v554
      %v572 = vpop.xlane.xlu0 %571
      %573 = vmax.xlane.f32.xlu0 %v555
      %v574 = vpop.xlane.xlu0 %573
      %575 = vmax.xlane.f32.xlu0 %v556
      %v576 = vpop.xlane.xlu0 %575
      %577 = vmax.xlane.f32.xlu0 %v557
      %v578 = vpop.xlane.xlu0 %577
      %579 = vmax.xlane.f32.xlu0 %v558
      %v580 = vpop.xlane.xlu0 %579
      %581 = vmax.xlane.f32.xlu0 %v559
      %v582 = vpop.xlane.xlu0 %581
      %583 = vmax.xlane.f32.xlu0 %v560
      %v584 = vpop.xlane.xlu0 %583
      %585 = vmax.xlane.f32.xlu0 %v561
      %v586 = vpop.xlane.xlu0 %585
      %587 = vmax.xlane.f32.xlu0 %v562
      %v588 = vpop.xlane.xlu0 %587
      %589 = vmax.xlane.f32.xlu0 %v563
      %v590 = vpop.xlane.xlu0 %589
      %591 = vmax.xlane.f32.xlu0 %v564
      %v592 = vpop.xlane.xlu0 %591
      %593 = vmax.xlane.f32.xlu0 %v565
      %v594 = vpop.xlane.xlu0 %593
      %595 = vmax.xlane.f32.xlu0 %v566
      %v596 = vpop.xlane.xlu0 %595
      %597 = vmax.xlane.f32.xlu0 %v567
      %v598 = vpop.xlane.xlu0 %597
      %599 = vmax.xlane.f32.xlu0 %v568
      %v600 = vpop.xlane.xlu0 %599
      %v601 = vsub.f32 %v553, %v570
      %v602 = vsub.f32 %v554, %v572
      %v603 = vsub.f32 %v555, %v574
      %v604 = vsub.f32 %v556, %v576
      %v605 = vsub.f32 %v557, %v578
      %v606 = vsub.f32 %v558, %v580
      %v607 = vsub.f32 %v559, %v582
      %v608 = vsub.f32 %v560, %v584
      %v609 = vsub.f32 %v561, %v586
      %v610 = vsub.f32 %v562, %v588
      %v611 = vsub.f32 %v563, %v590
      %v612 = vsub.f32 %v564, %v592
      %v613 = vsub.f32 %v565, %v594
      %v614 = vsub.f32 %v566, %v596
      %v615 = vsub.f32 %v567, %v598
      %v616 = vsub.f32 %v568, %v600
      %v617 = vmul.f32 %v601, 1.442695
      %v618 = vpow.pop %v617
      %v619 = vmul.f32 %v602, 1.442695
      %v620 = vpow.pop %v619
      %v621 = vmul.f32 %v603, 1.442695
      %v622 = vpow.pop %v621
      %v623 = vmul.f32 %v604, 1.442695
      %v624 = vpow.pop %v623
      %v625 = vmul.f32 %v605, 1.442695
      %v626 = vpow.pop %v625
      %v627 = vmul.f32 %v606, 1.442695
      %v628 = vpow.pop %v627
      %v629 = vmul.f32 %v607, 1.442695
      %v630 = vpow.pop %v629
      %v631 = vmul.f32 %v608, 1.442695
      %v632 = vpow.pop %v631
      %v633 = vmul.f32 %v609, 1.442695
      %v634 = vpow.pop %v633
      %v635 = vmul.f32 %v610, 1.442695
      %v636 = vpow.pop %v635
      %v637 = vmul.f32 %v611, 1.442695
      %v638 = vpow.pop %v637
      %v639 = vmul.f32 %v612, 1.442695
      %v640 = vpow.pop %v639
      %v641 = vmul.f32 %v613, 1.442695
      %v642 = vpow.pop %v641
      %v643 = vmul.f32 %v614, 1.442695
      %v644 = vpow.pop %v643
      %v645 = vmul.f32 %v615, 1.442695
      %v646 = vpow.pop %v645
      %v647 = vmul.f32 %v616, 1.442695
      %v648 = vpow.pop %v647
      %649 = vadd.xlane.f32.xlu0 %v618
      %v650 = vpop.xlane.xlu0 %649
      %651 = vadd.xlane.f32.xlu0 %v620
      %v652 = vpop.xlane.xlu0 %651
      %653 = vadd.xlane.f32.xlu0 %v622
      %v654 = vpop.xlane.xlu0 %653
      %655 = vadd.xlane.f32.xlu0 %v624
      %v656 = vpop.xlane.xlu0 %655
      %657 = vadd.xlane.f32.xlu0 %v626
      %v658 = vpop.xlane.xlu0 %657
      %659 = vadd.xlane.f32.xlu0 %v628
      %v660 = vpop.xlane.xlu0 %659
      %661 = vadd.xlane.f32.xlu0 %v630
      %v662 = vpop.xlane.xlu0 %661
      %663 = vadd.xlane.f32.xlu0 %v632
      %v664 = vpop.xlane.xlu0 %663
      %665 = vadd.xlane.f32.xlu0 %v634
      %v666 = vpop.xlane.xlu0 %665
      %667 = vadd.xlane.f32.xlu0 %v636
      %v668 = vpop.xlane.xlu0 %667
      %669 = vadd.xlane.f32.xlu0 %v638
      %v670 = vpop.xlane.xlu0 %669
      %671 = vadd.xlane.f32.xlu0 %v640
      %v672 = vpop.xlane.xlu0 %671
      %673 = vadd.xlane.f32.xlu0 %v642
      %v674 = vpop.xlane.xlu0 %673
      %675 = vadd.xlane.f32.xlu0 %v644
      %v676 = vpop.xlane.xlu0 %675
      %677 = vadd.xlane.f32.xlu0 %v646
      %v678 = vpop.xlane.xlu0 %677
      %679 = vadd.xlane.f32.xlu0 %v648
      %v680 = vpop.xlane.xlu0 %679
      %v681 = vrcp.pop %v650
      %v682 = vrcp.pop %v652
      %v683 = vrcp.pop %v654
      %v684 = vrcp.pop %v656
      %v685 = vrcp.pop %v658
      %v686 = vrcp.pop %v660
      %v687 = vrcp.pop %v662
      %v688 = vrcp.pop %v664
      %v689 = vrcp.pop %v666
      %v690 = vrcp.pop %v668
      %v691 = vrcp.pop %v670
      %v692 = vrcp.pop %v672
      %v693 = vrcp.pop %v674
      %v694 = vrcp.pop %v676
      %v695 = vrcp.pop %v678
      %v696 = vrcp.pop %v680
      %v697 = vmul.f32 %v618, %v681
      %v698 = vmul.f32 %v620, %v682
      %v699 = vmul.f32 %v622, %v683
      %v700 = vmul.f32 %v624, %v684
      %v701 = vmul.f32 %v626, %v685
      %v702 = vmul.f32 %v628, %v686
      %v703 = vmul.f32 %v630, %v687
      %v704 = vmul.f32 %v632, %v688
      %v705 = vmul.f32 %v634, %v689
      %v706 = vmul.f32 %v636, %v690
      %v707 = vmul.f32 %v638, %v691
      %v708 = vmul.f32 %v640, %v692
      %v709 = vmul.f32 %v642, %v693
      %v710 = vmul.f32 %v644, %v694
      %v711 = vmul.f32 %v646, %v695
      %v712 = vmul.f32 %v648, %v696
      %713 = vst [vmem:[%s226] sm:$0xff] %v697
      %714 = vst [vmem:[%s226 + $0x8] sm:$0xff] %v698
      %715 = vst [vmem:[%s226 + $0x10] sm:$0xff] %v699
      %716 = vst [vmem:[%s226 + $0x18] sm:$0xff] %v700
      %717 = vst [vmem:[%s226 + $0x20] sm:$0xff] %v701
      %718 = vst [vmem:[%s226 + $0x28] sm:$0xff] %v702
      %719 = vst [vmem:[%s226 + $0x30] sm:$0xff] %v703
      %720 = vst [vmem:[%s226 + $0x38] sm:$0xff] %v704
      %721 = vst [vmem:[%s226 + $0x40] sm:$0xff] %v705
      %722 = vst [vmem:[%s226 + $0x48] sm:$0xff] %v706
      %723 = vst [vmem:[%s226 + $0x50] sm:$0xff] %v707
      %724 = vst [vmem:[%s226 + $0x58] sm:$0xff] %v708
      %725 = vst [vmem:[%s226 + $0x60] sm:$0xff] %v709
      %726 = vst [vmem:[%s226 + $0x68] sm:$0xff] %v710
      %727 = vst [vmem:[%s226 + $0x70] sm:$0xff] %v711
      %728 = vst [vmem:[%s226 + $0x78] sm:$0xff] %v712
      %s729 = smul.u32 16, %s16
      %p730 = scmp.lt.s32.totalorder %s729, 31
      %s731 = scalar_select %p730, %s729, 31
      %s732 = smul.addr %s731, 8
      %s733 = scalar_lea.vmem %s5, %s732
      // Predicated region
      $region41: #{qlearner_forward.1} parent=39 // pred_check
        %p734 = pneg %p144
      $region42: #{qlearner_forward.1} parent=39 // pred_check_branch
        %736 = sbr.rel (%p734) target = $region44
      $region43: #{qlearner_forward.1} parent=39 // pred_region
        %s737 = smul.u32 16, %s16
      $region44: #{qlearner_forward.1} parent=39 // pred_fallthru
        _
    $region40: #{qlearner_forward.1} parent=5 // pred_fallthru
      _
    %p738 = scmp.le.s32.totalorder 2, %s11
    // Predicated region
    $region45: #{qlearner_forward.1} parent=5 // pred_check
      %p739 = pneg %p738
    $region46: #{qlearner_forward.1} parent=5 // pred_check_branch
      %741 = sbr.rel (%p739) target = $region48
    $region47: #{qlearner_forward.1} parent=5 // pred_region
      %s742 = ssub.s32 %s11, 2
      // Predicated region
      $region49: #{qlearner_forward.1} parent=47 // pred_check
        %p743 = pneg %p150
      $region50: #{qlearner_forward.1} parent=47 // pred_check_branch
        %745 = sbr.rel (%p743) target = $region52
      $region51: #{qlearner_forward.1} parent=47 // pred_region
        %s746 = smul.u32 16, %s17
        %p747 = scmp.lt.s32.totalorder %s746, 31
        %s748 = scalar_select %p747, %s746, 31
        %s749 = smul.addr %s748, 8
        %s750 = scalar_lea.vmem %s5, %s749
      $region52: #{qlearner_forward.1} parent=47 // pred_fallthru
        _
    $region48: #{qlearner_forward.1} parent=5 // pred_fallthru
      _
  $region6: #{qlearner_forward.1} parent=0 // loop_footer
    %s15 = sadd.s32 1, %s11
  $region7: #{qlearner_forward.1} parent=0 // loop_footer_branch
    %10 = sbr.rel target = $region3
  $region8: #{qlearner_forward.1} parent=0 // loop_exit
    _

</llo_original>
